<compile_context>
chip_gen: v6e
topology: v6e:2x2x1
jax: 0.10.0
libtpu: 0.0.40
codegen_flags: <defaults>
</compile_context>

<pallas_src>
import functools

import jax
import jax.numpy as jnp
from jax.experimental import pallas as pl
from jax.experimental.pallas import tpu as pltpu


def _round_up(x, m):
    return ((x + m - 1) // m) * m


def _cluster_mlp_kernel(x_ref, w_ref, g_ref, b_ref, o_ref):
    # x_ref: (bm, pack*hash_dim)                 packed rows
    # w_ref: (pack*hash_dim, pack*cluster_num)   block-diag replication of W^T
    # g_ref: (pack*cluster_num, pack*cluster_num) block-diag ones (group-sum mat)
    # b_ref: (1, pack*cluster_num)               tiled bias
    # o_ref: (bm, pack*cluster_num)              lane-dense output
    y = jnp.dot(x_ref[...], w_ref[...], preferred_element_type=jnp.float32)
    y = y + b_ref[...]
    # Per-original-row sum of squares, computed lane-dense on the MXU: each
    # cluster_num-wide lane group sums its own squares and broadcasts in-group.
    sq = jnp.dot(y * y, g_ref[...], preferred_element_type=jnp.float32)
    # F.normalize(p=2, dim=1): y / max(||y||, 1e-12) == y * rsqrt(max(sum_sq, 1e-24))
    o_ref[...] = (y * jax.lax.rsqrt(jnp.maximum(sq, 1e-24))).astype(o_ref.dtype)


def build_cluster_mlp_params(weight, bias):
    """Once-per-weight-update prep, hoisted out of the forward path.

    weight: (cluster_num, hash_dim)  nn.Linear weight (== prototypes)
    bias:   (cluster_num,)
    Returns (w_big, g, b_big) prebuilt arrays for cluster_mlp_forward.
    """
    cluster_num, hash_dim = weight.shape
    pack = 128 // cluster_num if (cluster_num <= 128 and 128 % cluster_num == 0) else 1
    k_big = pack * hash_dim
    n_big = pack * cluster_num

    w_t = weight.T.astype(jnp.float32)  # (hash_dim, cluster_num)
    if pack == 1:
        w_big = w_t
        g = jnp.ones((n_big, n_big), jnp.float32)
        b_big = bias.astype(jnp.float32)
    else:
        eye = jnp.eye(pack, dtype=jnp.float32)
        # w_big[p*hash_dim + d, q*cluster_num + j] = (p == q) * w_t[d, j]
        w_big = jnp.einsum("pq,dj->pdqj", eye, w_t).reshape(k_big, n_big)
        g = jnp.kron(eye, jnp.ones((cluster_num, cluster_num), jnp.float32))
        b_big = jnp.tile(bias.astype(jnp.float32), pack)
    b_big = b_big.reshape(1, n_big)
    return w_big, g, b_big


@functools.partial(jax.jit, static_argnames=("cluster_num", "block_rows"))
def cluster_mlp_forward(x, w_big, g, b_big, *, cluster_num, block_rows=1024):
    """Forward pass. x: (B, hash_dim) f32; prebuilt params from build_cluster_mlp_params."""
    B, hash_dim = x.shape
    k_big = w_big.shape[0]
    n_big = b_big.shape[-1]
    pack = n_big // cluster_num

    # Pad at most (pack - 1) rows so the packing reshape stays contiguous; when
    # B % pack == 0 there is no pad and no post-kernel slice at all.
    m_needed = pl.cdiv(B, pack)
    b_packed = m_needed * pack
    x = x.astype(jnp.float32)
    if b_packed != B:
        x = jnp.pad(x, ((0, b_packed - B), (0, 0)))
    x_packed = x.reshape(m_needed, k_big)  # row-major bitcast of the packing

    # Tile-size selection:
    #  * >= 2 (even number of) tiles whenever there is enough work so the
    #    ("parallel",) grid axis shards across both v7x TensorCores;
    #  * tiles capped at block_rows packed rows to amortise per-step overhead;
    #  * ragged last tile handled by Pallas edge-block masking (grid = cdiv);
    #  * if one tile covers everything, use bm == m_needed exactly (block dim
    #    == full array dim), so no padding/masking is ever needed there.
    ntiles = pl.cdiv(m_needed, block_rows)
    if ntiles == 1 and m_needed >= 16:
        ntiles = 2
    if ntiles > 1 and ntiles % 2 == 1:
        ntiles += 1
    bm = _round_up(pl.cdiv(m_needed, ntiles), 8)
    if bm >= m_needed:
        bm = m_needed
    grid = (pl.cdiv(m_needed, bm),)

    flops = 2 * m_needed * n_big * (k_big + n_big) + 3 * m_needed * n_big
    bytes_accessed = 4 * (
        m_needed * (k_big + n_big) + k_big * n_big + n_big * n_big + n_big
    )
    cost = pl.CostEstimate(
        flops=flops,
        transcendentals=m_needed * n_big,
        bytes_accessed=bytes_accessed,
    )

    out_packed = pl.pallas_call(
        _cluster_mlp_kernel,
        out_shape=jax.ShapeDtypeStruct((m_needed, n_big), jnp.float32),
        grid_spec=pltpu.PrefetchScalarGridSpec(
            num_scalar_prefetch=0,
            grid=grid,
            in_specs=[
                pl.BlockSpec((bm, k_big), lambda i: (i, 0)),
                pl.BlockSpec((k_big, n_big), lambda i: (0, 0)),   # resident
                pl.BlockSpec((n_big, n_big), lambda i: (0, 0)),   # resident
                pl.BlockSpec((1, n_big), lambda i: (0, 0)),       # resident
            ],
            out_specs=pl.BlockSpec((bm, n_big), lambda i: (i, 0)),
        ),
        compiler_params=pltpu.CompilerParams(
            dimension_semantics=("parallel",),  # shards batch tiles across v7x TCs
        ),
        cost_estimate=cost,
    )(x_packed, w_big, g, b_big)

    # (m_needed, pack*cluster_num) row-major == (b_packed, cluster_num) row-major.
    out = out_packed.reshape(b_packed, cluster_num)
    if b_packed != B:
        out = out[:B]
    return out


def reference_forward(x, weight, bias):
    y = x @ weight.T + bias
    norm = jnp.sqrt(jnp.sum(y * y, axis=1, keepdims=True))
    return y / jnp.maximum(norm, 1e-12)


if __name__ == "__main__":
    # Small shapes consistent with the module: hash_dim=32, cluster_num=16, batch=16.
    hash_dim = 32
    cluster_num = 16
    batch = 16

    key = jax.random.PRNGKey(0)
    k_x, k_proto, k_bias = jax.random.split(key, 3)

    # "prototypes" is the nn.Linear weight: (cluster_num, hash_dim).
    prototypes = jax.random.normal(k_proto, (cluster_num, hash_dim), dtype=jnp.float32)
    # nn.Linear default bias init: uniform(-1/sqrt(in_features), 1/sqrt(in_features)).
    bound = 1.0 / jnp.sqrt(jnp.float32(hash_dim))
    bias = jax.random.uniform(
        k_bias, (cluster_num,), dtype=jnp.float32, minval=-bound, maxval=bound
    )

    x = jax.random.normal(k_x, (batch, hash_dim), dtype=jnp.float32)

    # Weight prep runs once (outside the per-call forward path).
    w_big, g, b_big = build_cluster_mlp_params(prototypes, bias)

    out = cluster_mlp_forward(x, w_big, g, b_big, cluster_num=cluster_num)
    out = jax.block_until_ready(out)

    ref = reference_forward(x, prototypes, bias)
    assert out.shape == ref.shape, "shape mismatch vs reference"
    assert jnp.allclose(out, ref, atol=1e-4, rtol=1e-4), "mismatch vs reference"

    print("KERNEL_OK")
</pallas_src>

<mosaic_0001>
module attributes {stable_mosaic.version = 11 : i64} {
  func.func @_cluster_mlp_kernel(%arg0: i32, %arg1: memref<2x256xf32, #tpu.memory_space<vmem>>, %arg2: memref<256x128xf32, #tpu.memory_space<vmem>>, %arg3: memref<128x128xf32, #tpu.memory_space<vmem>>, %arg4: memref<1x128xf32, #tpu.memory_space<vmem>>, %arg5: memref<2x128xf32, #tpu.memory_space<vmem>>) attributes {dimension_semantics = [#tpu.dimension_semantics<parallel>], iteration_bounds = array<i64: 1>, scalar_prefetch = 0 : i64, scratch_operands = 0 : i64, tpu.core_type = #tpu.core_type<tc>, window_params = [{transform_indices = @transform_0, window_bounds = array<i64: 2, 256>}, {pipeline_mode = #tpu.pipeline_mode<synchronous>, transform_indices = @transform_1, window_bounds = array<i64: 256, 128>}, {pipeline_mode = #tpu.pipeline_mode<synchronous>, transform_indices = @transform_2, window_bounds = array<i64: 128, 128>}, {pipeline_mode = #tpu.pipeline_mode<synchronous>, transform_indices = @transform_3, window_bounds = array<i64: 1, 128>}, {transform_indices = @transform_4, window_bounds = array<i64: 2, 128>}]} {
    %c0 = arith.constant 0 : index
    %c0_0 = arith.constant 0 : index
    %0 = vector.load %arg1[%c0, %c0_0] : memref<2x256xf32, #tpu.memory_space<vmem>>, vector<2x256xf32>
    %c0_1 = arith.constant 0 : index
    %c0_2 = arith.constant 0 : index
    %1 = vector.load %arg2[%c0_1, %c0_2] : memref<256x128xf32, #tpu.memory_space<vmem>>, vector<256x128xf32>
    %cst = arith.constant dense<0.000000e+00> : vector<2x128xf32>
    %2 = tpu.matmul %0, %1, %cst {dimension_numbers = #tpu.dot_dimension_numbers<[1], [0], [0], [1], [0, 0, 1, 1], [], []>} : vector<2x256xf32>, vector<256x128xf32>, vector<2x128xf32> -> vector<2x128xf32>
    %c0_3 = arith.constant 0 : index
    %c0_4 = arith.constant 0 : index
    %3 = vector.load %arg4[%c0_3, %c0_4] : memref<1x128xf32, #tpu.memory_space<vmem>>, vector<1x128xf32>
    %4 = vector.broadcast %3 : vector<1x128xf32> to vector<2x128xf32>
    %5 = arith.addf %2, %4 : vector<2x128xf32>
    %6 = arith.mulf %5, %5 : vector<2x128xf32>
    %c0_5 = arith.constant 0 : index
    %c0_6 = arith.constant 0 : index
    %7 = vector.load %arg3[%c0_5, %c0_6] : memref<128x128xf32, #tpu.memory_space<vmem>>, vector<128x128xf32>
    %cst_7 = arith.constant dense<0.000000e+00> : vector<2x128xf32>
    %8 = tpu.matmul %6, %7, %cst_7 {dimension_numbers = #tpu.dot_dimension_numbers<[1], [0], [0], [1], [0, 0, 1, 1], [], []>} : vector<2x128xf32>, vector<128x128xf32>, vector<2x128xf32> -> vector<2x128xf32>
    %cst_8 = arith.constant 1.000000e-24 : f32
    %9 = vector.broadcast %cst_8 : f32 to vector<2x128xf32>
    %10 = arith.maximumf %8, %9 : vector<2x128xf32>
    %11 = math.rsqrt %10 : vector<2x128xf32>
    %12 = arith.mulf %5, %11 : vector<2x128xf32>
    %c0_9 = arith.constant 0 : index
    %c0_10 = arith.constant 0 : index
    %13 = vector.load %arg5[%c0_9, %c0_10] : memref<2x128xf32, #tpu.memory_space<vmem>>, vector<2x128xf32>
    tpu.vector_store %arg5[%c0_9, %c0_10], %12 {strides = array<i32>} : memref<2x128xf32, #tpu.memory_space<vmem>>, vector<2x128xf32>,
    return
  }
  func.func @transform_0(%arg0: i32) -> (i32, i32) {
    %c0_i32 = arith.constant 0 : i32
    %c0_i32_0 = arith.constant 0 : i32
    return %arg0, %c0_i32 : i32, i32
  }
  func.func @transform_1(%arg0: i32) -> (i32, i32) {
    %c0_i32 = arith.constant 0 : i32
    %c0_i32_0 = arith.constant 0 : i32
    %c0_i32_1 = arith.constant 0 : i32
    return %c0_i32, %c0_i32_0 : i32, i32
  }
  func.func @transform_2(%arg0: i32) -> (i32, i32) {
    %c0_i32 = arith.constant 0 : i32
    %c0_i32_0 = arith.constant 0 : i32
    %c0_i32_1 = arith.constant 0 : i32
    return %c0_i32, %c0_i32_0 : i32, i32
  }
  func.func @transform_3(%arg0: i32) -> (i32, i32) {
    %c0_i32 = arith.constant 0 : i32
    %c0_i32_0 = arith.constant 0 : i32
    %c0_i32_1 = arith.constant 0 : i32
    return %c0_i32, %c0_i32_0 : i32, i32
  }
  func.func @transform_4(%arg0: i32) -> (i32, i32) {
    %c0_i32 = arith.constant 0 : i32
    %c0_i32_0 = arith.constant 0 : i32
    return %arg0, %c0_i32 : i32, i32
  }
}

</mosaic_0001>

<llo_original>
// kernel: cluster_mlp_forward.1
$region0: #{cluster_mlp_forward.1}
  #allocation0 [shape = 'u32[]', space=smem, size = 0x4, offset = 0x4, fixed_abs, tag = 'smem constant byte address 0x4 - core index']
  #allocation1 [shape = 'u32[144,128]{1,0:T(1,128)}', space=vmem, size = 0x12000, scoped, tag = 'internal scratch']
  %s0 = inlined_call_operand.vmem [shape: f32[2,256], index: 0, kind: input, shape index: {}]
  %s1 = inlined_call_operand.hbm [shape: f32[256,128], index: 1, kind: input, shape index: {}]
  %s2 = inlined_call_operand.hbm [shape: f32[128,128], index: 2, kind: input, shape index: {}]
  %s3 = inlined_call_operand.vmem [shape: f32[1,128], index: 3, kind: input, shape index: {}]
  %s4 = inlined_call_operand.vmem [shape: f32[2,128], index: 4, kind: output, shape index: {}]
  %s5 = sld [smem:[#allocation0]]
  $region34: #{cluster_mlp_forward.1} parent=0
    _
  %s7 = ssub.s32 1, %s5
  %s8 = scalar_select 0, %s7, %s5
  $region1: #{cluster_mlp_forward.1} parent=0
    #allocation2 [shape = 'u8[131072]{0}', space=vmem, size = 0x20000, scoped, tag = 'input window, operand 1, single buffered']
    #allocation3 [shape = 's32[1]{0}', space=sflag, size = 0x4, scoped, tag = 'scoped memory for cluster_mlp_forward.1']
    #allocation4 [shape = 'u8[65536]{0}', space=vmem, size = 0x10000, scoped, tag = 'input window, operand 2, single buffered']
    #allocation5 [shape = 's32[1]{0}', space=sflag, size = 0x4, scoped, tag = 'scoped memory for cluster_mlp_forward.1']
    %9 = vsyncpa [#allocation3], 0
    %10 = vsyncpa [#allocation5], 0
    // Predicated region
    $region2: #{cluster_mlp_forward.1} parent=1 // pred_check
      _
    $region3: #{cluster_mlp_forward.1} parent=1 // pred_check_branch
      %12 = sbr.rel (0) target = $region5
    $region4: #{cluster_mlp_forward.1} parent=1 // pred_region
      _
    $region5: #{cluster_mlp_forward.1} parent=1 // pred_fallthru
      _
    // Predicated region
    $region6: #{cluster_mlp_forward.1} parent=1 // pred_check
      _
    $region7: #{cluster_mlp_forward.1} parent=1 // pred_check_branch
      %14 = sbr.rel (0) target = $region9
    $region8: #{cluster_mlp_forward.1} parent=1 // pred_region
      %s16 = ssub.s32 4096, 4096
      %17 = vsyncadd [#allocation3], %s16
      %s18 = sshll.u32 [#allocation2], 4
      %s19 = int_to_ptr.vmem [resolvable:$true] %s18
      %24 = dma.hbm_to_vmem [thread:$0]  %s1, 4096, %s19, [#allocation3], 128, 128, 8
    $region9: #{cluster_mlp_forward.1} parent=1 // pred_fallthru
      _
    // Predicated region
    $region10: #{cluster_mlp_forward.1} parent=1 // pred_check
      _
    $region11: #{cluster_mlp_forward.1} parent=1 // pred_check_branch
      %26 = sbr.rel (0) target = $region13
    $region12: #{cluster_mlp_forward.1} parent=1 // pred_region
      %s28 = ssub.s32 2048, 2048
      %29 = vsyncadd [#allocation5], %s28
      %s30 = sshll.u32 [#allocation4], 4
      %s31 = int_to_ptr.vmem [resolvable:$true] %s30
      %36 = dma.hbm_to_vmem [thread:$0]  %s2, 2048, %s31, [#allocation5], 128, 128, 8
    $region13: #{cluster_mlp_forward.1} parent=1 // pred_fallthru
      _
    // Predicated region
    $region14: #{cluster_mlp_forward.1} parent=1 // pred_check
      _
    $region15: #{cluster_mlp_forward.1} parent=1 // pred_check_branch
      %38 = sbr.rel (0) target = $region17
    $region16: #{cluster_mlp_forward.1} parent=1 // pred_region
      _
    $region17: #{cluster_mlp_forward.1} parent=1 // pred_fallthru
      _
    // Predicated region
    $region18: #{cluster_mlp_forward.1} parent=1 // pred_check
      _
    $region19: #{cluster_mlp_forward.1} parent=1 // pred_check_branch
      %40 = sbr.rel (0) target = $region21
    $region20: #{cluster_mlp_forward.1} parent=1 // pred_region
      %41 = dma.done [#allocation3], 4096
    $region21: #{cluster_mlp_forward.1} parent=1 // pred_fallthru
      _
    // Predicated region
    $region22: #{cluster_mlp_forward.1} parent=1 // pred_check
      _
    $region23: #{cluster_mlp_forward.1} parent=1 // pred_check_branch
      %43 = sbr.rel (0) target = $region25
    $region24: #{cluster_mlp_forward.1} parent=1 // pred_region
      %44 = dma.done [#allocation5], 2048
    $region25: #{cluster_mlp_forward.1} parent=1 // pred_fallthru
      _
    %v45 = vld [vmem:[%s0] sm:$0xf]
    %v46 = vld [vmem:[#allocation2] sm:$0xff]
    %v47 = vld [vmem:[#allocation2 + $0x8] sm:$0xff]
    %v48 = vld [vmem:[#allocation2 + $0x10] sm:$0xff]
    %v49 = vld [vmem:[#allocation2 + $0x18] sm:$0xff]
    %v50 = vld [vmem:[#allocation2 + $0x20] sm:$0xff]
    %v51 = vld [vmem:[#allocation2 + $0x28] sm:$0xff]
    %v52 = vld [vmem:[#allocation2 + $0x30] sm:$0xff]
    %v53 = vld [vmem:[#allocation2 + $0x38] sm:$0xff]
    %v54 = vld [vmem:[#allocation2 + $0x40] sm:$0xff]
    %v55 = vld [vmem:[#allocation2 + $0x48] sm:$0xff]
    %v56 = vld [vmem:[#allocation2 + $0x50] sm:$0xff]
    %v57 = vld [vmem:[#allocation2 + $0x58] sm:$0xff]
    %v58 = vld [vmem:[#allocation2 + $0x60] sm:$0xff]
    %v59 = vld [vmem:[#allocation2 + $0x68] sm:$0xff]
    %v60 = vld [vmem:[#allocation2 + $0x70] sm:$0xff]
    %v61 = vld [vmem:[#allocation2 + $0x78] sm:$0xff]
    %v62 = vld [vmem:[#allocation2 + $0x80] sm:$0xff]
    %v63 = vld [vmem:[#allocation2 + $0x88] sm:$0xff]
    %v64 = vld [vmem:[#allocation2 + $0x90] sm:$0xff]
    %v65 = vld [vmem:[#allocation2 + $0x98] sm:$0xff]
    %v66 = vld [vmem:[#allocation2 + $0xa0] sm:$0xff]
    %v67 = vld [vmem:[#allocation2 + $0xa8] sm:$0xff]
    %v68 = vld [vmem:[#allocation2 + $0xb0] sm:$0xff]
    %v69 = vld [vmem:[#allocation2 + $0xb8] sm:$0xff]
    %v70 = vld [vmem:[#allocation2 + $0xc0] sm:$0xff]
    %v71 = vld [vmem:[#allocation2 + $0xc8] sm:$0xff]
    %v72 = vld [vmem:[#allocation2 + $0xd0] sm:$0xff]
    %v73 = vld [vmem:[#allocation2 + $0xd8] sm:$0xff]
    %v74 = vld [vmem:[#allocation2 + $0xe0] sm:$0xff]
    %v75 = vld [vmem:[#allocation2 + $0xe8] sm:$0xff]
    %v76 = vld [vmem:[#allocation2 + $0xf0] sm:$0xff]
    %v77 = vld [vmem:[#allocation2 + $0xf8] sm:$0xff]
    %v78 = vld [vmem:[%s3] sm:$0x1]
    %v80 = vlaneseq
    %v81 = vshrl.u32 %v80, 7
    %v82 = vsub.s32 0, %v81
    %v83 = vrot.slane %v78, %v82
    %v87 = vunpack.c.l.s4 1983009808
    %v88 = vunpack.c.0.s8 %v87
    %v89 = vlaneseq
    %v90 = vshrl.u32 %v89, 7
    %v91 = vsub.s32 %v88, %v90
    %v92 = vrot.slane %v45, %v91
    %v93 = vcombine.high %v92, %v92
    %96 = vmatprep.subr.mxu0 0.0
    %97 = vmatpush1.msra.mxu0 %v61
    %98 = vmatprep.subr.mxu0 0.0
    %99 = vmatpush1.msra.mxu0 %v60
    %100 = vmatprep.subr.mxu0 0.0
    %101 = vmatpush1.msra.mxu0 %v59
    %102 = vmatprep.subr.mxu0 0.0
    %103 = vmatpush1.msra.mxu0 %v58
    %104 = vmatprep.subr.mxu0 0.0
    %105 = vmatpush1.msra.mxu0 %v57
    %106 = vmatprep.subr.mxu0 0.0
    %107 = vmatpush1.msra.mxu0 %v56
    %108 = vmatprep.subr.mxu0 0.0
    %109 = vmatpush1.msra.mxu0 %v55
    %110 = vmatprep.subr.mxu0 0.0
    %111 = vmatpush1.msra.mxu0 %v54
    %112 = vmatprep.subr.mxu0 0.0
    %113 = vmatpush1.msra.mxu0 %v53
    %114 = vmatprep.subr.mxu0 0.0
    %115 = vmatpush1.msra.mxu0 %v52
    %116 = vmatprep.subr.mxu0 0.0
    %117 = vmatpush1.msra.mxu0 %v51
    %118 = vmatprep.subr.mxu0 0.0
    %119 = vmatpush1.msra.mxu0 %v50
    %120 = vmatprep.subr.mxu0 0.0
    %121 = vmatpush1.msra.mxu0 %v49
    %122 = vmatprep.subr.mxu0 0.0
    %123 = vmatpush1.msra.mxu0 %v48
    %124 = vmatprep.subr.mxu0 0.0
    %125 = vmatpush1.msra.mxu0 %v47
    %126 = vmatprep.subr.mxu0 0.0
    %127 = vmatpush1.msra.mxu0 %v46
    %128 = vmatprep.subr.mxu0 0.0
    %129 = vmatpush2.msra.mxu0 %v77
    %130 = vmatprep.subr.mxu0 0.0
    %131 = vmatpush2.msra.mxu0 %v76
    %132 = vmatprep.subr.mxu0 0.0
    %133 = vmatpush2.msra.mxu0 %v75
    %134 = vmatprep.subr.mxu0 0.0
    %135 = vmatpush2.msra.mxu0 %v74
    %136 = vmatprep.subr.mxu0 0.0
    %137 = vmatpush2.msra.mxu0 %v73
    %138 = vmatprep.subr.mxu0 0.0
    %139 = vmatpush2.msra.mxu0 %v72
    %140 = vmatprep.subr.mxu0 0.0
    %141 = vmatpush2.msra.mxu0 %v71
    %142 = vmatprep.subr.mxu0 0.0
    %143 = vmatpush2.msra.mxu0 %v70
    %144 = vmatprep.subr.mxu0 0.0
    %145 = vmatpush2.msra.mxu0 %v69
    %146 = vmatprep.subr.mxu0 0.0
    %147 = vmatpush2.msra.mxu0 %v68
    %148 = vmatprep.subr.mxu0 0.0
    %149 = vmatpush2.msra.mxu0 %v67
    %150 = vmatprep.subr.mxu0 0.0
    %151 = vmatpush2.msra.mxu0 %v66
    %152 = vmatprep.subr.mxu0 0.0
    %153 = vmatpush2.msra.mxu0 %v65
    %154 = vmatprep.subr.mxu0 0.0
    %155 = vmatpush2.msra.mxu0 %v64
    %156 = vmatprep.subr.mxu0 0.0
    %157 = vmatpush2.msra.mxu0 %v63
    %158 = vmatprep.subr.mxu0 0.0
    %159 = vmatpush2.msra.mxu0 %v62
    %160 = vmatprep.mubr.f32.mxu0 %v93
    %161 = vmatmul.mubr.f32.gmra.mxu0 %v92
    %v162 = vpop.f32.mrf.mxu0
    %v163 = vadd.f32 %v83, %v162
    %v164 = vpop.f32.mrf.mxu0
    %165 = vdwg.mxu0
    %v166 = vmul.f32 %v163, %v163
    %v167 = vld [vmem:[#allocation4] sm:$0xff]
    %v168 = vld [vmem:[#allocation4 + $0x8] sm:$0xff]
    %v169 = vld [vmem:[#allocation4 + $0x10] sm:$0xff]
    %v170 = vld [vmem:[#allocation4 + $0x18] sm:$0xff]
    %v171 = vld [vmem:[#allocation4 + $0x20] sm:$0xff]
    %v172 = vld [vmem:[#allocation4 + $0x28] sm:$0xff]
    %v173 = vld [vmem:[#allocation4 + $0x30] sm:$0xff]
    %v174 = vld [vmem:[#allocation4 + $0x38] sm:$0xff]
    %v175 = vld [vmem:[#allocation4 + $0x40] sm:$0xff]
    %v176 = vld [vmem:[#allocation4 + $0x48] sm:$0xff]
    %v177 = vld [vmem:[#allocation4 + $0x50] sm:$0xff]
    %v178 = vld [vmem:[#allocation4 + $0x58] sm:$0xff]
    %v179 = vld [vmem:[#allocation4 + $0x60] sm:$0xff]
    %v180 = vld [vmem:[#allocation4 + $0x68] sm:$0xff]
    %v181 = vld [vmem:[#allocation4 + $0x70] sm:$0xff]
    %v182 = vld [vmem:[#allocation4 + $0x78] sm:$0xff]
    %183 = vmatprep.subr.mxu0 0.0
    %184 = vmatpush1.msra.mxu0 %v182
    %185 = vmatprep.subr.mxu0 0.0
    %186 = vmatpush1.msra.mxu0 %v181
    %187 = vmatprep.subr.mxu0 0.0
    %188 = vmatpush1.msra.mxu0 %v180
    %189 = vmatprep.subr.mxu0 0.0
    %190 = vmatpush1.msra.mxu0 %v179
    %191 = vmatprep.subr.mxu0 0.0
    %192 = vmatpush1.msra.mxu0 %v178
    %193 = vmatprep.subr.mxu0 0.0
    %194 = vmatpush1.msra.mxu0 %v177
    %195 = vmatprep.subr.mxu0 0.0
    %196 = vmatpush1.msra.mxu0 %v176
    %197 = vmatprep.subr.mxu0 0.0
    %198 = vmatpush1.msra.mxu0 %v175
    %199 = vmatprep.subr.mxu0 0.0
    %200 = vmatpush1.msra.mxu0 %v174
    %201 = vmatprep.subr.mxu0 0.0
    %202 = vmatpush1.msra.mxu0 %v173
    %203 = vmatprep.subr.mxu0 0.0
    %204 = vmatpush1.msra.mxu0 %v172
    %205 = vmatprep.subr.mxu0 0.0
    %206 = vmatpush1.msra.mxu0 %v171
    %207 = vmatprep.subr.mxu0 0.0
    %208 = vmatpush1.msra.mxu0 %v170
    %209 = vmatprep.subr.mxu0 0.0
    %210 = vmatpush1.msra.mxu0 %v169
    %211 = vmatprep.subr.mxu0 0.0
    %212 = vmatpush1.msra.mxu0 %v168
    %213 = vmatprep.subr.mxu0 0.0
    %214 = vmatpush1.msra.mxu0 %v167
    %215 = vmatprep.subr.mxu0 0.0
    %216 = vmatpush2.msra.mxu0 0.0
    %217 = vmatprep.subr.mxu0 0.0
    %218 = vmatpush2.msra.mxu0 0.0
    %219 = vmatprep.subr.mxu0 0.0
    %220 = vmatpush2.msra.mxu0 0.0
    %221 = vmatprep.subr.mxu0 0.0
    %222 = vmatpush2.msra.mxu0 0.0
    %223 = vmatprep.subr.mxu0 0.0
    %224 = vmatpush2.msra.mxu0 0.0
    %225 = vmatprep.subr.mxu0 0.0
    %226 = vmatpush2.msra.mxu0 0.0
    %227 = vmatprep.subr.mxu0 0.0
    %228 = vmatpush2.msra.mxu0 0.0
    %229 = vmatprep.subr.mxu0 0.0
    %230 = vmatpush2.msra.mxu0 0.0
    %231 = vmatprep.subr.mxu0 0.0
    %232 = vmatpush2.msra.mxu0 0.0
    %233 = vmatprep.subr.mxu0 0.0
    %234 = vmatpush2.msra.mxu0 0.0
    %235 = vmatprep.subr.mxu0 0.0
    %236 = vmatpush2.msra.mxu0 0.0
    %237 = vmatprep.subr.mxu0 0.0
    %238 = vmatpush2.msra.mxu0 0.0
    %239 = vmatprep.subr.mxu0 0.0
    %240 = vmatpush2.msra.mxu0 0.0
    %241 = vmatprep.subr.mxu0 0.0
    %242 = vmatpush2.msra.mxu0 0.0
    %243 = vmatprep.subr.mxu0 0.0
    %244 = vmatpush2.msra.mxu0 0.0
    %245 = vmatprep.subr.mxu0 0.0
    %246 = vmatpush2.msra.mxu0 0.0
    %247 = vmatprep.mubr.f32.mxu0 0.0
    %248 = vmatmul.mubr.f32.gmra.mxu0 %v166
    %v249 = vpop.f32.mrf.mxu0
    %v250 = vadd.f32 0.0, %v249
    %v251 = vpop.f32.mrf.mxu0
    %252 = vdwg.mxu0
    %v253 = vmax.f32 %v250, 1e-24
    %v254 = vrsqrt.pop %v253
    %v255 = vmul.f32 %v163, %v254
    %256 = vst [vmem:[%s4] sm:$0x3] %v255
    // Predicated region
    $region26: #{cluster_mlp_forward.1} parent=1 // pred_check
      _
    $region27: #{cluster_mlp_forward.1} parent=1 // pred_check_branch
      %258 = sbr.rel (0) target = $region29
    $region28: #{cluster_mlp_forward.1} parent=1 // pred_region
      _
    $region29: #{cluster_mlp_forward.1} parent=1 // pred_fallthru
      _
    // Predicated region
    $region30: #{cluster_mlp_forward.1} parent=1 // pred_check
      _
    $region31: #{cluster_mlp_forward.1} parent=1 // pred_check_branch
      %260 = sbr.rel (0) target = $region33
    $region32: #{cluster_mlp_forward.1} parent=1 // pred_region
      _
    $region33: #{cluster_mlp_forward.1} parent=1 // pred_fallthru
      _
    %261 = vsyncpa [#allocation3], 1
    %262 = vsyncpa [#allocation5], 1

</llo_original>
